<compile_context>
chip_gen: v7x
topology: tpu7x:2x2x1
jax: 0.10.0
libtpu: 0.0.40
codegen_flags: <defaults>
</compile_context>

<pallas_src>
import math
from functools import partial

import jax
import jax.numpy as jnp
from jax.experimental import pallas as pl
from jax.experimental.pallas import tpu as pltpu


# ----------------------------------------------------------------------------
# Tiling helpers
# ----------------------------------------------------------------------------
def _sublane_align(dtype):
    """Sublane alignment: 8 rows for 32-bit, 16 for 16-bit, 32 for 8-bit."""
    return 8 * max(1, 4 // jnp.dtype(dtype).itemsize)


def _pick_tile(dim, target, align):
    """Largest tile <= target that is a multiple of `align` and divides `dim`;
    falls back to the full dimension (always a legal BlockSpec size)."""
    if dim <= target:
        return dim
    t = (target // align) * align
    while t >= align:
        if dim % t == 0:
            return t
        t -= align
    return dim


def _pick_head_group(n_head, hd):
    """Heads per attention block so the lane (last) block dim G*hd is a
    multiple of 128 (lane-dense stores) or, failing that, spans all heads."""
    if hd % 128 == 0:
        return 1
    if 128 % hd == 0 and n_head % (128 // hd) == 0:
        return 128 // hd
    return n_head


# ----------------------------------------------------------------------------
# Tiled linear:  y = x @ w + b     (x: (M, K), w: (K, N), b: (N,))
# ----------------------------------------------------------------------------
def _linear_kernel(x_ref, w_ref, b_ref, o_ref, acc_ref):
    k = pl.program_id(2)

    @pl.when(k == 0)
    def _init():
        acc_ref[...] = jnp.zeros_like(acc_ref)

    acc_ref[...] += jnp.dot(x_ref[...], w_ref[...],
                            preferred_element_type=jnp.float32)

    @pl.when(k == pl.num_programs(2) - 1)
    def _finalize():
        o_ref[...] = (acc_ref[...] + b_ref[...]).astype(o_ref.dtype)


def pallas_linear(x2d, w, b, *, tm=1024, tn=512, tk=512):
    M, K = x2d.shape
    N = w.shape[1]
    sub = _sublane_align(x2d.dtype)
    tm = _pick_tile(M, tm, sub)    # sublane-aligned row tile (dtype-aware)
    tn = _pick_tile(N, tn, 128)    # lane-dense / MXU-aligned output tile
    tk = _pick_tile(K, tk, 128)    # reduction tile (last grid axis)
    grid = (M // tm, N // tn, K // tk)
    return pl.pallas_call(
        _linear_kernel,
        out_shape=jax.ShapeDtypeStruct((M, N), x2d.dtype),
        grid=grid,
        in_specs=[
            pl.BlockSpec((tm, tk), lambda i, j, k: (i, k)),
            pl.BlockSpec((tk, tn), lambda i, j, k: (k, j)),
            pl.BlockSpec((1, tn), lambda i, j, k: (0, j)),
        ],
        out_specs=pl.BlockSpec((tm, tn), lambda i, j, k: (i, j)),
        scratch_shapes=[pltpu.VMEM((tm, tn), jnp.float32)],
        compiler_params=pltpu.CompilerParams(
            dimension_semantics=("parallel", "parallel", "arbitrary"),
            vmem_limit_bytes=64 * 1024 * 1024,
        ),
    )(x2d, w, b.reshape(1, N))


# ----------------------------------------------------------------------------
# Flash-style multi-head attention on (B, T, C) layout (heads via BlockSpec)
# ----------------------------------------------------------------------------
def _flash_attn_kernel(q_ref, k_ref, v_ref, o_ref, q_sc, m_sc, l_sc, acc_sc,
                       *, scale, causal, tq, tk, G, hd):
    qi = pl.program_id(2)
    ki = pl.program_id(3)

    @pl.when(ki == 0)
    def _init():
        # q block is ki-invariant: do the scale + per-head relayout ONCE per
        # q tile and keep it in VMEM for all KV iterations.
        q_sc[...] = (q_ref[0].astype(jnp.float32) * scale).reshape(
            tq, G, hd).swapaxes(0, 1)                             # (G, tq, hd)
        m_sc[...] = jnp.full_like(m_sc, -jnp.inf)
        l_sc[...] = jnp.zeros_like(l_sc)
        acc_sc[...] = jnp.zeros_like(acc_sc)

    def _compute(masked):
        k = k_ref[0].reshape(tk, G, hd).swapaxes(0, 1)            # (G, tk, hd)
        v = v_ref[0].reshape(tk, G, hd).swapaxes(0, 1)            # (G, tk, hd)
        # QK^T: contract last dims (no materialized k.T).
        s = jnp.einsum("gqd,gkd->gqk", q_sc[...], k,
                       preferred_element_type=jnp.float32)        # (G, tq, tk)
        if masked:
            row = qi * tq + jax.lax.broadcasted_iota(jnp.int32, (tq, tk), 0)
            col = ki * tk + jax.lax.broadcasted_iota(jnp.int32, (tq, tk), 1)
            s = jnp.where((col <= row)[None, :, :], s, -jnp.inf)
        m_prev = m_sc[...]                                        # (G, tq, 1)
        m_new = jnp.maximum(m_prev, jnp.max(s, axis=-1, keepdims=True))
        alpha = jnp.exp(m_prev - m_new)
        p = jnp.exp(s - m_new)
        l_sc[...] = alpha * l_sc[...] + jnp.sum(p, axis=-1, keepdims=True)
        acc_sc[...] = alpha * acc_sc[...] + jnp.einsum(
            "gqk,gkd->gqd", p.astype(v.dtype), v,
            preferred_element_type=jnp.float32)
        m_sc[...] = m_new

    if causal:
        needed = ki * tk <= qi * tq + (tq - 1)      # tile has >=1 unmasked col
        straddles = ki * tk + (tk - 1) > qi * tq    # tile crosses the diagonal
        # Interior (fully below diagonal) tiles: unmasked fast path.
        pl.when(needed & jnp.logical_not(straddles))(partial(_compute, False))
        # Diagonal-straddling tiles: apply the mask.
        pl.when(needed & straddles)(partial(_compute, True))
    else:
        _compute(False)

    @pl.when(ki == pl.num_programs(3) - 1)
    def _finalize():
        inv_l = pl.reciprocal(l_sc[...], approx=False)
        out = acc_sc[...] * inv_l                                 # (G, tq, hd)
        o_ref[0] = out.swapaxes(0, 1).reshape(tq, G * hd).astype(o_ref.dtype)


def pallas_mha(q_src, kv_src, *, n_embd, n_head, causal,
               q_col=0, k_col=0, v_col=0):
    """Flash attention over (B, T, ·) activations.  q / k / v live inside
    q_src / kv_src at element-column offsets q_col / k_col / v_col (e.g. the
    output of a fused qkv projection); heads and the q/k/v columns are
    addressed through BlockSpec index_maps — no split or transpose in HBM."""
    C = n_embd
    hd = C // n_head
    G = _pick_head_group(n_head, hd)
    Ghd = G * hd

    if Ghd % 128 != 0:
        # Fallback (small models): Ghd == C.  A (·, Ghd) block column inside a
        # wider fused array is not lane-legal, so pre-slice (cheap at small C).
        if q_src.shape[-1] != C or q_col != 0:
            q_src = jax.lax.slice_in_dim(q_src, q_col, q_col + C, axis=-1)
        if kv_src.shape[-1] == C and k_col == 0:
            k_arr = kv_src
        else:
            k_arr = jax.lax.slice_in_dim(kv_src, k_col, k_col + C, axis=-1)
        if kv_src.shape[-1] == C and v_col == 0:
            v_arr = kv_src
        else:
            v_arr = jax.lax.slice_in_dim(kv_src, v_col, v_col + C, axis=-1)
        q_col = k_col = v_col = 0
    else:
        k_arr = kv_src
        v_arr = kv_src

    assert q_col % Ghd == 0 and k_col % Ghd == 0 and v_col % Ghd == 0
    q_blk, k_blk, v_blk = q_col // Ghd, k_col // Ghd, v_col // Ghd

    B, Tq = q_src.shape[0], q_src.shape[1]
    Tk = k_arr.shape[1]
    itemsize = jnp.dtype(q_src.dtype).itemsize
    sub = _sublane_align(q_src.dtype)
    # Bigger tiles amortize per-step overhead; byte-cap each (t, Ghd) block
    # (~1 MiB) so the double-buffered q/k/v/o blocks + scratch stay well
    # inside v7x's 64 MiB VMEM even on the Ghd == C fallback path.
    base = 512 if hd >= 128 else 256
    cap = max(sub, (1 << 20) // max(1, Ghd * itemsize))
    tq = _pick_tile(Tq, max(sub, min(base, cap)), sub)
    tk = _pick_tile(Tk, max(sub, min(base, cap)), sub)

    scale = 1.0 / math.sqrt(hd)
    grid = (B, n_head // G, Tq // tq, Tk // tk)

    if causal:
        def kv_row(qi, ki):
            # Clamp above-diagonal KV tiles to the last needed block: the
            # repeated block index makes Pallas skip the (wasted) K/V DMA.
            return jnp.minimum(ki, (qi * tq + (tq - 1)) // tk)
    else:
        def kv_row(qi, ki):
            return ki

    kernel = partial(_flash_attn_kernel, scale=scale, causal=causal,
                     tq=tq, tk=tk, G=G, hd=hd)
    return pl.pallas_call(
        kernel,
        out_shape=jax.ShapeDtypeStruct((B, Tq, C), q_src.dtype),
        grid=grid,
        in_specs=[
            pl.BlockSpec((1, tq, Ghd),
                         lambda b, g, qi, ki: (b, qi, g + q_blk)),
            pl.BlockSpec((1, tk, Ghd),
                         lambda b, g, qi, ki: (b, kv_row(qi, ki), g + k_blk)),
            pl.BlockSpec((1, tk, Ghd),
                         lambda b, g, qi, ki: (b, kv_row(qi, ki), g + v_blk)),
        ],
        out_specs=pl.BlockSpec((1, tq, Ghd),
                               lambda b, g, qi, ki: (b, qi, g)),
        scratch_shapes=[
            pltpu.VMEM((G, tq, hd), jnp.float32),   # hoisted scaled q
            pltpu.VMEM((G, tq, 1), jnp.float32),    # running max m
            pltpu.VMEM((G, tq, 1), jnp.float32),    # running denom l
            pltpu.VMEM((G, tq, hd), jnp.float32),   # output accumulator
        ],
        compiler_params=pltpu.CompilerParams(
            dimension_semantics=("parallel", "parallel", "parallel",
                                 "arbitrary"),
            vmem_limit_bytes=64 * 1024 * 1024,
        ),
    )(q_src, k_arr, v_arr)


# ----------------------------------------------------------------------------
# Parameter init + forward (glue in plain JAX, hot path in Pallas)
# ----------------------------------------------------------------------------
def init_params(key, n_embd, self_attention):
    ks = jax.random.split(key, 8)
    std = 0.02

    def lin(kw, kb, in_dim, out_dim):
        # stored as (in, out): equivalent to PyTorch weight.T
        w = std * jax.random.normal(kw, (in_dim, out_dim), jnp.float32)
        b = std * jax.random.normal(kb, (out_dim,), jnp.float32)
        return w, b

    p = {}
    if self_attention:
        p["c_attn_w"], p["c_attn_b"] = lin(ks[0], ks[1], n_embd, 3 * n_embd)
    else:
        p["c_attn1_w"], p["c_attn1_b"] = lin(ks[2], ks[3], n_embd, 2 * n_embd)
        p["c_attn2_w"], p["c_attn2_b"] = lin(ks[4], ks[5], n_embd, n_embd)
    p["c_proj_w"], p["c_proj_b"] = lin(ks[6], ks[7], n_embd, n_embd)
    return p


def attention_forward(params, x, encoder_out=None, *, n_head, causal,
                      self_attention):
    B, T, C = x.shape
    if self_attention:
        # ONE fused qkv projection: x read from HBM once, one launch.
        qkv = pallas_linear(x.reshape(B * T, C),
                            params["c_attn_w"], params["c_attn_b"])
        qkv = qkv.reshape(B, T, 3 * C)
        y = pallas_mha(qkv, qkv, n_embd=C, n_head=n_head, causal=causal,
                       q_col=0, k_col=C, v_col=2 * C)
    else:
        assert encoder_out is not None
        _, T_enc, _ = encoder_out.shape
        # ONE fused k/v projection of the encoder activations.
        kv = pallas_linear(encoder_out.reshape(B * T_enc, C),
                           params["c_attn1_w"], params["c_attn1_b"])
        kv = kv.reshape(B, T_enc, 2 * C)
        q = pallas_linear(x.reshape(B * T, C),
                          params["c_attn2_w"], params["c_attn2_b"])
        q = q.reshape(B, T, C)
        y = pallas_mha(q, kv, n_embd=C, n_head=n_head, causal=causal,
                       q_col=0, k_col=0, v_col=C)

    y = pallas_linear(y.reshape(B * T, C),
                      params["c_proj_w"], params["c_proj_b"])
    # TODO(synk): attention/residual dropout (training) not implemented (eval: p=0).
    return y.reshape(B, T, C)


# Pure-JAX reference (matches the PyTorch math) for a correctness check.
def attention_ref(params, x, encoder_out=None, *, n_head, causal,
                  self_attention):
    B, T, C = x.shape
    hd = C // n_head
    if self_attention:
        qkv = x @ params["c_attn_w"] + params["c_attn_b"]
        q, k, v = jnp.split(qkv, 3, axis=2)
        Tk = T
    else:
        _, T_enc, _ = encoder_out.shape
        kv = encoder_out @ params["c_attn1_w"] + params["c_attn1_b"]
        k, v = jnp.split(kv, 2, axis=2)
        q = x @ params["c_attn2_w"] + params["c_attn2_b"]
        Tk = T_enc
    q = q.reshape(B, T, n_head, hd).transpose(0, 2, 1, 3)
    k = k.reshape(B, Tk, n_head, hd).transpose(0, 2, 1, 3)
    v = v.reshape(B, Tk, n_head, hd).transpose(0, 2, 1, 3)
    att = jnp.einsum("bhqd,bhkd->bhqk", q, k) / math.sqrt(hd)
    if causal:
        mask = jnp.tril(jnp.ones((T, Tk), bool))
        att = jnp.where(mask[None, None], att, -jnp.inf)
    att = jax.nn.softmax(att, axis=-1)
    y = jnp.einsum("bhqk,bhkd->bhqd", att, v)
    y = y.transpose(0, 2, 1, 3).reshape(B, T, C)
    return y @ params["c_proj_w"] + params["c_proj_b"]


if __name__ == "__main__":
    B, T, T_enc, n_embd, n_head = 2, 8, 16, 32, 4
    key = jax.random.PRNGKey(0)
    kx, kenc, kp1, kp2 = jax.random.split(key, 4)
    x = jax.random.normal(kx, (B, T, n_embd), jnp.float32)
    encoder_out = jax.random.normal(kenc, (B, T_enc, n_embd), jnp.float32)

    # --- causal self-attention ---
    p_self = init_params(kp1, n_embd, self_attention=True)
    y_self = attention_forward(
        p_self, x, n_head=n_head, causal=True, self_attention=True
    )
    jax.block_until_ready(y_self)
    y_self_ref = attention_ref(
        p_self, x, n_head=n_head, causal=True, self_attention=True
    )
    assert jnp.allclose(y_self, y_self_ref, atol=2e-3, rtol=2e-3), float(
        jnp.max(jnp.abs(y_self - y_self_ref))
    )

    # --- cross-attention (non-causal, encoder length != decoder length) ---
    p_cross = init_params(kp2, n_embd, self_attention=False)
    y_cross = attention_forward(
        p_cross, x, encoder_out, n_head=n_head, causal=False,
        self_attention=False
    )
    jax.block_until_ready(y_cross)
    y_cross_ref = attention_ref(
        p_cross, x, encoder_out, n_head=n_head, causal=False,
        self_attention=False
    )
    assert jnp.allclose(y_cross, y_cross_ref, atol=2e-3, rtol=2e-3), float(
        jnp.max(jnp.abs(y_cross - y_cross_ref))
    )

    print("KERNEL_OK")
</pallas_src>

<mosaic_0001>
module attributes {stable_mosaic.version = 11 : i64} {
  func.func @_linear_kernel(%arg0: i32, %arg1: i32, %arg2: i32, %arg3: memref<16x32xf32, #tpu.memory_space<vmem>>, %arg4: memref<32x96xf32, #tpu.memory_space<vmem>>, %arg5: memref<1x96xf32, #tpu.memory_space<vmem>>, %arg6: memref<16x96xf32, #tpu.memory_space<vmem>>, %arg7: memref<16x96xf32, #tpu.memory_space<vmem>>) attributes {dimension_semantics = [#tpu.dimension_semantics<parallel>, #tpu.dimension_semantics<parallel>, #tpu.dimension_semantics<arbitrary>], iteration_bounds = array<i64: 1, 1, 1>, scalar_prefetch = 0 : i64, scratch_operands = 1 : i64, tpu.core_type = #tpu.core_type<tc>, window_params = [{transform_indices = @transform_0, window_bounds = array<i64: 16, 32>}, {transform_indices = @transform_1, window_bounds = array<i64: 32, 96>}, {transform_indices = @transform_2, window_bounds = array<i64: 1, 96>}, {transform_indices = @transform_3, window_bounds = array<i64: 16, 96>}]} {
    %c0_i32 = arith.constant 0 : i32
    %0 = arith.cmpi eq, %arg2, %c0_i32 : i32
    %1 = arith.extui %0 : i1 to i32
    %c0_i32_0 = arith.constant 0 : i32
    %2 = arith.cmpi ne, %1, %c0_i32_0 : i32
    scf.if %2 {
      %cst_10 = arith.constant 0.000000e+00 : f32
      %12 = vector.broadcast %cst_10 : f32 to vector<16x96xf32>
      %c0_11 = arith.constant 0 : index
      %c0_12 = arith.constant 0 : index
      %13 = vector.load %arg7[%c0_11, %c0_12] : memref<16x96xf32, #tpu.memory_space<vmem>>, vector<16x96xf32>
      tpu.vector_store %arg7[%c0_11, %c0_12], %12 {strides = array<i32>} : memref<16x96xf32, #tpu.memory_space<vmem>>, vector<16x96xf32>,
    } else {
    }
    %c0 = arith.constant 0 : index
    %c0_1 = arith.constant 0 : index
    %3 = vector.load %arg7[%c0, %c0_1] : memref<16x96xf32, #tpu.memory_space<vmem>>, vector<16x96xf32>
    %c0_2 = arith.constant 0 : index
    %c0_3 = arith.constant 0 : index
    %4 = vector.load %arg3[%c0_2, %c0_3] : memref<16x32xf32, #tpu.memory_space<vmem>>, vector<16x32xf32>
    %c0_4 = arith.constant 0 : index
    %c0_5 = arith.constant 0 : index
    %5 = vector.load %arg4[%c0_4, %c0_5] : memref<32x96xf32, #tpu.memory_space<vmem>>, vector<32x96xf32>
    %cst = arith.constant dense<0.000000e+00> : vector<16x96xf32>
    %6 = tpu.matmul %4, %5, %cst {dimension_numbers = #tpu.dot_dimension_numbers<[1], [0], [0], [1], [0, 0, 1, 1], [], []>} : vector<16x32xf32>, vector<32x96xf32>, vector<16x96xf32> -> vector<16x96xf32>
    %7 = arith.addf %3, %6 : vector<16x96xf32>
    %c0_6 = arith.constant 0 : index
    %c0_7 = arith.constant 0 : index
    %8 = vector.load %arg7[%c0_6, %c0_7] : memref<16x96xf32, #tpu.memory_space<vmem>>, vector<16x96xf32>
    tpu.vector_store %arg7[%c0_6, %c0_7], %7 {strides = array<i32>} : memref<16x96xf32, #tpu.memory_space<vmem>>, vector<16x96xf32>,
    %c0_i32_8 = arith.constant 0 : i32
    %9 = arith.cmpi eq, %arg2, %c0_i32_8 : i32
    %10 = arith.extui %9 : i1 to i32
    %c0_i32_9 = arith.constant 0 : i32
    %11 = arith.cmpi ne, %10, %c0_i32_9 : i32
    scf.if %11 {
      %c0_10 = arith.constant 0 : index
      %c0_11 = arith.constant 0 : index
      %12 = vector.load %arg7[%c0_10, %c0_11] : memref<16x96xf32, #tpu.memory_space<vmem>>, vector<16x96xf32>
      %c0_12 = arith.constant 0 : index
      %c0_13 = arith.constant 0 : index
      %13 = vector.load %arg5[%c0_12, %c0_13] : memref<1x96xf32, #tpu.memory_space<vmem>>, vector<1x96xf32>
      %14 = vector.broadcast %13 : vector<1x96xf32> to vector<16x96xf32>
      %15 = arith.addf %12, %14 : vector<16x96xf32>
      %c0_14 = arith.constant 0 : index
      %c0_15 = arith.constant 0 : index
      %16 = vector.load %arg6[%c0_14, %c0_15] : memref<16x96xf32, #tpu.memory_space<vmem>>, vector<16x96xf32>
      tpu.vector_store %arg6[%c0_14, %c0_15], %15 {strides = array<i32>} : memref<16x96xf32, #tpu.memory_space<vmem>>, vector<16x96xf32>,
    } else {
    }
    return
  }
  func.func @transform_0(%arg0: i32, %arg1: i32, %arg2: i32) -> (i32, i32) {
    %c0_i32 = arith.constant 0 : i32
    return %arg0, %arg2 : i32, i32
  }
  func.func @transform_1(%arg0: i32, %arg1: i32, %arg2: i32) -> (i32, i32) {
    %c0_i32 = arith.constant 0 : i32
    return %arg2, %arg1 : i32, i32
  }
  func.func @transform_2(%arg0: i32, %arg1: i32, %arg2: i32) -> (i32, i32) {
    %c0_i32 = arith.constant 0 : i32
    %c0_i32_0 = arith.constant 0 : i32
    return %c0_i32, %arg1 : i32, i32
  }
  func.func @transform_3(%arg0: i32, %arg1: i32, %arg2: i32) -> (i32, i32) {
    %c0_i32 = arith.constant 0 : i32
    return %arg0, %arg1 : i32, i32
  }
}

</mosaic_0001>

<llo_original>
// kernel: tpu_custom_call.1
$region0: #{tpu_custom_call.1}
  #allocation0 [shape = 'u32[]', space=smem, size = 0x4, offset = 0x4, fixed_abs, tag = 'smem constant byte address 0x4 - core index']
  #allocation1 [shape = 'u32[144,128]{1,0:T(1,128)}', space=vmem, size = 0x12000, scoped, tag = 'internal scratch']
  #allocation2 [shape = 'f32[16,96]{1,0:T(8,128)}', space=vmem, size = 0x2000, scoped, tag = 'scratch operand']
  %s0 = inlined_call_operand.hbm [shape: f32[16,32], index: 0, kind: input, shape index: {}]
  %s1 = inlined_call_operand.hbm [shape: f32[32,96], index: 1, kind: input, shape index: {}]
  %s2 = inlined_call_operand.hbm [shape: f32[1,96], index: 2, kind: input, shape index: {}]
  %s3 = inlined_call_operand.hbm [shape: f32[16,96], index: 3, kind: output, shape index: {}]
  %s4 = sld [smem:[#allocation0]]
  $region42: #{tpu_custom_call.1} parent=0
    _
  %s6 = ssub.s32 1, %s4
  %s7 = scalar_select 0, %s6, %s4
  $region1: #{tpu_custom_call.1} parent=0
    #allocation3 [shape = 'u8[8192]{0}', space=vmem, size = 0x2000, scoped, tag = 'input window, operand 0, single buffered']
    #allocation4 [shape = 's32[1]{0}', space=sflag, size = 0x4, scoped, tag = 'scoped memory for tpu_custom_call.1']
    #allocation5 [shape = 's32[1]{0}', space=sflag, size = 0x4, scoped, tag = 'scoped memory for tpu_custom_call.1']
    #allocation6 [shape = 'u8[16384]{0}', space=vmem, size = 0x4000, scoped, tag = 'input window, operand 1, single buffered']
    #allocation7 [shape = 's32[1]{0}', space=sflag, size = 0x4, scoped, tag = 'scoped memory for tpu_custom_call.1']
    #allocation8 [shape = 'u8[512]{0}', space=vmem, size = 0x400, scoped, tag = 'input window, operand 2, single buffered']
    #allocation9 [shape = 'u8[8192]{0}', space=vmem, size = 0x2000, scoped, tag = 'output window, operand 0, single buffered']
    %8 = vsyncpa [#allocation4], 0
    %9 = vsyncpa [#allocation7], 0
    %10 = vsyncpa [#allocation5], 0
    // Predicated region
    $region2: #{tpu_custom_call.1} parent=1 // pred_check
      _
    $region3: #{tpu_custom_call.1} parent=1 // pred_check_branch
      %12 = sbr.rel (0) target = $region5
    $region4: #{tpu_custom_call.1} parent=1 // pred_region
      %s14 = ssub.s32 256, 256
      %15 = vsyncadd [#allocation4], %s14
      %s16 = sshll.u32 [#allocation3], 4
      %s17 = int_to_ptr.vmem [resolvable:$true] %s16
      %22 = dma.hbm_to_vmem [thread:$0]  %s0, 256, %s17, [#allocation4], 128, 128, 8
    $region5: #{tpu_custom_call.1} parent=1 // pred_fallthru
      _
    // Predicated region
    $region6: #{tpu_custom_call.1} parent=1 // pred_check
      _
    $region7: #{tpu_custom_call.1} parent=1 // pred_check_branch
      %24 = sbr.rel (0) target = $region9
    $region8: #{tpu_custom_call.1} parent=1 // pred_region
      %s26 = ssub.s32 512, 512
      %27 = vsyncadd [#allocation7], %s26
      %s28 = sshll.u32 [#allocation6], 4
      %s29 = int_to_ptr.vmem [resolvable:$true] %s28
      %34 = dma.hbm_to_vmem [thread:$0]  %s1, 512, %s29, [#allocation7], 128, 128, 8
    $region9: #{tpu_custom_call.1} parent=1 // pred_fallthru
      _
    // Predicated region
    $region10: #{tpu_custom_call.1} parent=1 // pred_check
      _
    $region11: #{tpu_custom_call.1} parent=1 // pred_check_branch
      %36 = sbr.rel (0) target = $region13
    $region12: #{tpu_custom_call.1} parent=1 // pred_region
      %s38 = ssub.s32 16, 16
      %39 = vsyncadd [#allocation7], %s38
      %s41 = sshll.u32 [#allocation8], 4
      %s42 = int_to_ptr.vmem [resolvable:$true] %s41
      %44 = dma.hbm_to_vmem [thread:$0]  %s2, 16, %s42, [#allocation7]
    $region13: #{tpu_custom_call.1} parent=1 // pred_fallthru
      _
    // Predicated region
    $region14: #{tpu_custom_call.1} parent=1 // pred_check
      _
    $region15: #{tpu_custom_call.1} parent=1 // pred_check_branch
      %46 = sbr.rel (0) target = $region17
    $region16: #{tpu_custom_call.1} parent=1 // pred_region
      %47 = dma.done [#allocation4], 256
    $region17: #{tpu_custom_call.1} parent=1 // pred_fallthru
      _
    // Predicated region
    $region18: #{tpu_custom_call.1} parent=1 // pred_check
      _
    $region19: #{tpu_custom_call.1} parent=1 // pred_check_branch
      %49 = sbr.rel (0) target = $region21
    $region20: #{tpu_custom_call.1} parent=1 // pred_region
      %50 = dma.done [#allocation7], 512
    $region21: #{tpu_custom_call.1} parent=1 // pred_fallthru
      _
    // Predicated region
    $region22: #{tpu_custom_call.1} parent=1 // pred_check
      _
    $region23: #{tpu_custom_call.1} parent=1 // pred_check_branch
      %52 = sbr.rel (0) target = $region25
    $region24: #{tpu_custom_call.1} parent=1 // pred_region
      %53 = dma.done [#allocation7], 16
    $region25: #{tpu_custom_call.1} parent=1 // pred_fallthru
      _
    %p54 = scmp.eq.s32.totalorder 0, 0
    // Predicated region
    $region26: #{tpu_custom_call.1} parent=1 // pred_check
      %p55 = pneg %p54
    $region27: #{tpu_custom_call.1} parent=1 // pred_check_branch
      %57 = sbr.rel (%p55) target = $region29
    $region28: #{tpu_custom_call.1} parent=1 // pred_region
      %vm58 = vcmask 785408
      %59 = vst.msk [vmem:[#allocation2] sm:$0xff] %vm58, 0.0
      %60 = vst.msk [vmem:[#allocation2 + $0x8] sm:$0xff] %vm58, 0.0
    $region29: #{tpu_custom_call.1} parent=1 // pred_fallthru
      _
    %v61 = vld [vmem:[#allocation2] sm:$0xff]
    %v62 = vld [vmem:[#allocation2 + $0x8] sm:$0xff]
    %v63 = vld [vmem:[#allocation3] sm:$0xff]
    %v64 = vld [vmem:[#allocation3 + $0x8] sm:$0xff]
    %v65 = vld [vmem:[#allocation6] sm:$0xff]
    %v66 = vld [vmem:[#allocation6 + $0x8] sm:$0xff]
    %v67 = vld [vmem:[#allocation6 + $0x10] sm:$0xff]
    %v68 = vld [vmem:[#allocation6 + $0x18] sm:$0xff]
    %vm69 = vcmask 261120
    %v71 = vsel %vm69, %v63, 0
    %v74 = vsel %vm69, %v64, 0
    %76 = vmatprep.subr.mxu0 0.0
    %77 = vmatpush1.msra.mxu0 %v65
    %78 = vmatprep.subr.mxu0 0.0
    %79 = vmatpush1.msra.mxu0 %v66
    %80 = vmatprep.subr.mxu0 0.0
    %81 = vmatpush1.msra.mxu0 %v67
    %82 = vmatprep.subr.mxu0 0.0
    %83 = vmatpush1.msra.mxu0 %v68
    %84 = vmatprep.subr.mxu0 0.0
    %85 = vmatpush1.msra.mxu0 0.0
    %86 = vmatprep.subr.mxu0 0.0
    %87 = vmatpush1.msra.mxu0 0.0
    %88 = vmatprep.subr.mxu0 0.0
    %89 = vmatpush1.msra.mxu0 0.0
    %90 = vmatprep.subr.mxu0 0.0
    %91 = vmatpush1.msra.mxu0 0.0
    %92 = vmatprep.subr.mxu0 0.0
    %93 = vmatpush1.msra.mxu0 0.0
    %94 = vmatprep.subr.mxu0 0.0
    %95 = vmatpush1.msra.mxu0 0.0
    %96 = vmatprep.subr.mxu0 0.0
    %97 = vmatpush1.msra.mxu0 0.0
    %98 = vmatprep.subr.mxu0 0.0
    %99 = vmatpush1.msra.mxu0 0.0
    %100 = vmatprep.subr.mxu0 0.0
    %101 = vmatpush1.msra.mxu0 0.0
    %102 = vmatprep.subr.mxu0 0.0
    %103 = vmatpush1.msra.mxu0 0.0
    %104 = vmatprep.subr.mxu0 0.0
    %105 = vmatpush1.msra.mxu0 0.0
    %106 = vmatprep.subr.mxu0 0.0
    %107 = vmatpush1.msra.mxu0 0.0
    %108 = vmatprep.subr.mxu0 0.0
    %109 = vmatpush1.msra.mxu0 0.0
    %110 = vmatprep.subr.mxu0 0.0
    %111 = vmatpush1.msra.mxu0 0.0
    %112 = vmatprep.subr.mxu0 0.0
    %113 = vmatpush1.msra.mxu0 0.0
    %114 = vmatprep.subr.mxu0 0.0
    %115 = vmatpush1.msra.mxu0 0.0
    %116 = vmatprep.subr.mxu0 0.0
    %117 = vmatpush1.msra.mxu0 0.0
    %118 = vmatprep.subr.mxu0 0.0
    %119 = vmatpush1.msra.mxu0 0.0
    %120 = vmatprep.subr.mxu0 0.0
    %121 = vmatpush1.msra.mxu0 0.0
    %122 = vmatprep.subr.mxu0 0.0
    %123 = vmatpush1.msra.mxu0 0.0
    %124 = vmatprep.subr.mxu0 0.0
    %125 = vmatpush1.msra.mxu0 0.0
    %126 = vmatprep.subr.mxu0 0.0
    %127 = vmatpush1.msra.mxu0 0.0
    %128 = vmatprep.subr.mxu0 0.0
    %129 = vmatpush1.msra.mxu0 0.0
    %130 = vmatprep.subr.mxu0 0.0
    %131 = vmatpush1.msra.mxu0 0.0
    %132 = vmatprep.subr.mxu0 0.0
    %133 = vmatpush1.msra.mxu0 0.0
    %134 = vmatprep.subr.mxu0 0.0
    %135 = vmatpush1.msra.mxu0 0.0
    %136 = vmatprep.subr.mxu0 0.0
    %137 = vmatpush1.msra.mxu0 0.0
    %138 = vmatprep.subr.mxu0 0.0
    %139 = vmatpush1.msra.mxu0 0.0
    %140 = vmatprep.mubr.f32.mxu0 0.0
    %141 = vmatmul.mubr.f32.gmra.mrb[0].mxu0 %v71
    %v142 = vpop.f32.mrb[0].mxu0
    %v143 = vadd.f32 0.0, %v142
    %v144 = vpop.f32.mrb[0].mxu0
    %145 = vmatprep.mubr.f32.mxu0 0.0
    %146 = vmatmul.mubr.f32.gmra.mrb[0].mxu0 %v74
    %v147 = vpop.f32.mrb[0].mxu0
    %v148 = vadd.f32 0.0, %v147
    %v149 = vpop.f32.mrb[0].mxu0
    %150 = vdwg.mxu0
    %v151 = vadd.f32 %v61, %v143
    %v152 = vadd.f32 %v62, %v148
    %vm153 = vcmask 785408
    %154 = vst.msk [vmem:[#allocation2] sm:$0xff] %vm153, %v151
    %155 = vst.msk [vmem:[#allocation2 + $0x8] sm:$0xff] %vm153, %v152
    // Predicated region
    $region30: #{tpu_custom_call.1} parent=1 // pred_check
      %p156 = pneg %p54
    $region31: #{tpu_custom_call.1} parent=1 // pred_check_branch
      %158 = sbr.rel (%p156) target = $region33
    $region32: #{tpu_custom_call.1} parent=1 // pred_region
      %v159 = vld [vmem:[#allocation2] sm:$0xff]
      %v160 = vld [vmem:[#allocation2 + $0x8] sm:$0xff]
      %v161 = vld [vmem:[#allocation8] sm:$0x1]
      %v163 = vlaneseq
      %v164 = vshrl.u32 %v163, 7
      %v165 = vsub.s32 0, %v164
      %v166 = vrot.slane %v161, %v165
      %v168 = vadd.f32 %v159, %v166
      %v169 = vadd.f32 %v160, %v166
      %170 = vst.msk [vmem:[#allocation9] sm:$0xff] %vm153, %v168
      %171 = vst.msk [vmem:[#allocation9 + $0x8] sm:$0xff] %vm153, %v169
    $region33: #{tpu_custom_call.1} parent=1 // pred_fallthru
      _
    // Predicated region
    $region34: #{tpu_custom_call.1} parent=1 // pred_check
      _
    $region35: #{tpu_custom_call.1} parent=1 // pred_check_branch
      %173 = sbr.rel (0) target = $region37
    $region36: #{tpu_custom_call.1} parent=1 // pred_region
      %s175 = ssub.s32 256, 256
      %176 = vsyncadd [#allocation5], %s175
      %s177 = sshll.u32 [#allocation9], 4
      %s178 = int_to_ptr.vmem [resolvable:$true] %s177
      %183 = dma.vmem_to_hbm [thread:$0]  %s178, 256, %s3, [#allocation5], 128, 128, 8
    $region37: #{tpu_custom_call.1} parent=1 // pred_fallthru
      _
    // Predicated region
    $region38: #{tpu_custom_call.1} parent=1 // pred_check
      _
    $region39: #{tpu_custom_call.1} parent=1 // pred_check_branch
      %185 = sbr.rel (0) target = $region41
    $region40: #{tpu_custom_call.1} parent=1 // pred_region
      %186 = dma.done [#allocation5], 256
    $region41: #{tpu_custom_call.1} parent=1 // pred_fallthru
      _
    %187 = vsyncpa [#allocation4], 1
    %188 = vsyncpa [#allocation7], 1
    %189 = vsyncpa [#allocation5], 1

</llo_original>
